<compile_context>
chip_gen: v7x
topology: tpu7x:2x2x1
jax: 0.10.0
libtpu: 0.0.40
codegen_flags: <defaults>
</compile_context>

<pallas_src>
import functools

import jax
import jax.numpy as jnp
from jax.experimental import pallas as pl
from jax.experimental.pallas import tpu as pltpu


def _round_up(x, m):
    return ((x + m - 1) // m) * m


def _mlp_embedding_kernel(depth, idx_ref, opp_ref, emb_ref, w_opp_ref,
                          w1_ref, *rest):
    # rest = [wd_stack (if depth>0)], w_out, b_hidden, b_out, out
    if depth > 0:
        wd_ref = rest[0]
        rest = rest[1:]
    w_out_ref, b_hid_ref, b_out_ref, out_ref = rest

    idx = idx_ref[...]                                   # (TB, S) int32
    TB, S = idx.shape
    V, H = emb_ref.shape

    b_hid = b_hid_ref[...]                               # (depth + 2, H) f32

    # --- player branch: embedding lookup summed over S -----------------------
    # counts[b, v] = #occurrences of v in idx[b, :]; player = counts @ E.
    # Accumulate counts with S unrolled VPU compares (no (TB, S, V) tensor).
    vocab = jax.lax.broadcasted_iota(jnp.int32, (TB, V), 1)
    counts = jnp.zeros((TB, V), jnp.float32)
    for s in range(S):                                   # S is small; unrolled
        counts = counts + (idx[:, s:s + 1] == vocab).astype(jnp.float32)
    player = jnp.dot(counts.astype(jnp.bfloat16), emb_ref[...],
                     preferred_element_type=jnp.float32)  # (TB, H) f32

    # --- opp branch: Linear(1, H) + ReLU (VPU, f32) ---------------------------
    opp = opp_ref[...]                                   # (TB, 1) f32
    opp_h = jnp.maximum(opp * w_opp_ref[...] + b_hid[0:1, :], 0.0)  # (TB, H)

    # --- main head: concat([player, opp_h]) @ W1 + b1, ReLU -------------------
    # concat-matmul split: [p, o] @ W1 == p @ W1[:H] + o @ W1[H:]
    w1 = w1_ref[...]                                     # (2H, H) bf16
    h = jnp.dot(player.astype(jnp.bfloat16), w1[:H, :],
                preferred_element_type=jnp.float32)
    h = h + jnp.dot(opp_h.astype(jnp.bfloat16), w1[H:, :],
                    preferred_element_type=jnp.float32)
    h = jnp.maximum(h + b_hid[1:2, :], 0.0)

    # optional extra hidden layers (unrolled at trace time)
    for d in range(depth):
        h = jnp.maximum(
            jnp.dot(h.astype(jnp.bfloat16), wd_ref[d],
                    preferred_element_type=jnp.float32) + b_hid[2 + d:3 + d, :],
            0.0)

    out_ref[...] = (jnp.dot(h.astype(jnp.bfloat16), w_out_ref[...],
                            preferred_element_type=jnp.float32)
                    + b_out_ref[...]).astype(out_ref.dtype)


def mlp_embedding_forward(x, params, depth, *, batch_tile=512):
    """x: (B, S+1) float32 — first S columns are integer indices (as floats),
    last column is the scalar `opp` feature, matching the torch forward."""
    if x.ndim == 1:
        x = x[None, :]
    B = x.shape[0]
    S = x.shape[1] - 1
    idx = x[:, :-1].astype(jnp.int32)          # player indices (.long())
    opp = x[:, -1:].astype(jnp.float32)        # opp scalar

    V, H = params["emb"].shape
    out_dim = params["b_out"].shape[-1]

    # batch tiling (pad to a multiple of the tile; TB is a multiple of 8)
    TB = _round_up(max(8, min(batch_tile, _round_up(B, 8))), 8)
    Bp = _round_up(B, TB)
    if Bp != B:
        idx = jnp.pad(idx, ((0, Bp - B), (0, 0)))
        opp = jnp.pad(opp, ((0, Bp - B), (0, 0)))
    grid = (Bp // TB,)

    # pack / cast parameters: bf16 matmul operands, packed f32 biases
    emb = params["emb"].astype(jnp.bfloat16)
    w_opp = params["w_opp"].astype(jnp.float32)
    w1 = params["w1"].astype(jnp.bfloat16)
    w_out = params["w_out"].astype(jnp.bfloat16)
    b_hid = jnp.concatenate(
        [params["b_opp"], params["b1"]]
        + [params[f"bd{d}"] for d in range(depth)], axis=0).astype(jnp.float32)
    b_out = params["b_out"].astype(jnp.float32)

    args = [idx, opp, emb, w_opp, w1]
    if depth > 0:
        args.append(jnp.stack([params[f"wd{d}"] for d in range(depth)],
                              axis=0).astype(jnp.bfloat16))
    args += [w_out, b_hid, b_out]

    def const_spec(a):
        n = a.ndim
        return pl.BlockSpec(a.shape, lambda i, n=n: (0,) * n)

    in_specs = ([pl.BlockSpec((TB, S), lambda i: (i, 0)),      # idx (batch-tiled)
                 pl.BlockSpec((TB, 1), lambda i: (i, 0))]      # opp (batch-tiled)
                + [const_spec(a) for a in args[2:]])           # resident weights

    # scoped-VMEM budget: resident weights + 2x streamed tiles + activations
    resident = sum(int(a.size) * a.dtype.itemsize for a in args[2:])
    streamed = TB * (S * 4 + 4 + out_dim * 4)
    scratch = TB * 4 * (V + 8 * H)
    vmem_limit = min(int(1.25 * (resident + 2 * streamed + scratch)) + (2 << 20),
                     64 << 20)

    kernel = functools.partial(_mlp_embedding_kernel, depth)
    out = pl.pallas_call(
        kernel,
        out_shape=jax.ShapeDtypeStruct((Bp, out_dim), jnp.float32),
        grid=grid,
        in_specs=in_specs,
        out_specs=pl.BlockSpec((TB, out_dim), lambda i: (i, 0)),
        compiler_params=pltpu.CompilerParams(
            dimension_semantics=("parallel",),
            vmem_limit_bytes=vmem_limit),
    )(*args)
    return out[:B]


def init_params(key, hidden_dim, output_dim, input_range, depth):
    # deterministic synthetic init (shapes match MLPEmbedding.__init__ with
    # input_dim == 1, which is what the forward pass implies for `opp`)
    keys = jax.random.split(key, 6 + 2 * depth)
    p = {
        "emb":   jax.random.normal(keys[0], (input_range, hidden_dim),
                                   jnp.float32) * 0.1,
        "w_opp": jax.random.normal(keys[1], (1, hidden_dim), jnp.float32) * 0.1,
        "b_opp": jax.random.normal(keys[2], (1, hidden_dim), jnp.float32) * 0.1,
        "w1":    jax.random.normal(keys[3], (2 * hidden_dim, hidden_dim),
                                   jnp.float32) * 0.1,
        "b1":    jax.random.normal(keys[4], (1, hidden_dim), jnp.float32) * 0.1,
    }
    for d in range(depth):
        kd = jax.random.split(keys[5 + d], 2)
        p[f"wd{d}"] = jax.random.normal(kd[0], (hidden_dim, hidden_dim),
                                        jnp.float32) * 0.1
        p[f"bd{d}"] = jax.random.normal(kd[1], (1, hidden_dim),
                                        jnp.float32) * 0.1
    ko = jax.random.split(keys[-1], 2)
    p["w_out"] = jax.random.normal(ko[0], (hidden_dim, output_dim),
                                   jnp.float32) * 0.1
    p["b_out"] = jax.random.normal(ko[1], (1, output_dim), jnp.float32) * 0.1
    return p


def reference_forward(x, params, depth):
    # plain-JAX reference mirroring the torch module, with the same bf16
    # matmul-operand rounding the kernel uses (f32 accumulation).
    if x.ndim == 1:
        x = x[None, :]
    idx = x[:, :-1].astype(jnp.int32)
    opp = x[:, -1:].astype(jnp.float32)

    def mm(a, w):
        return jnp.dot(a.astype(jnp.bfloat16), w.astype(jnp.bfloat16),
                       preferred_element_type=jnp.float32)

    emb_b = params["emb"].astype(jnp.bfloat16).astype(jnp.float32)
    player = emb_b[idx].sum(axis=1)
    opp_h = jax.nn.relu(opp @ params["w_opp"] + params["b_opp"])
    h = jnp.concatenate([player, opp_h], axis=-1)
    h = jax.nn.relu(mm(h, params["w1"]) + params["b1"])
    for d in range(depth):
        h = jax.nn.relu(mm(h, params[f"wd{d}"]) + params[f"bd{d}"])
    return mm(h, params["w_out"]) + params["b_out"]


if __name__ == "__main__":
    B = 2              # batch
    S = 7              # number of player index slots (x has S + 1 columns)
    input_range = 16   # embedding vocab
    hidden_dim = 32    # NOTE: multiples of 128 would fully use the MXU lanes
    output_dim = 8
    depth = 1

    key = jax.random.PRNGKey(0)
    k_idx, k_opp, k_par = jax.random.split(key, 3)

    idx = jax.random.randint(k_idx, (B, S), 0, input_range)
    opp = jax.random.normal(k_opp, (B, 1), jnp.float32)
    x = jnp.concatenate([idx.astype(jnp.float32), opp], axis=-1)   # (B, S+1)

    params = init_params(k_par, hidden_dim, output_dim, input_range, depth)

    out = mlp_embedding_forward(x, params, depth)
    out = jax.block_until_ready(out)

    ref = reference_forward(x, params, depth)
    assert out.shape == (B, output_dim)
    assert jnp.allclose(out, ref, atol=2e-3, rtol=2e-3), (
        f"mismatch: max err {jnp.max(jnp.abs(out - ref))}")

    print("KERNEL_OK")
</pallas_src>

<mosaic_0001>
module attributes {stable_mosaic.version = 11 : i64} {
  func.func @_mlp_embedding_kernel(%arg0: i32, %arg1: memref<8x7xi32, #tpu.memory_space<vmem>>, %arg2: memref<8x1xf32, #tpu.memory_space<vmem>>, %arg3: memref<16x32xbf16, #tpu.memory_space<vmem>>, %arg4: memref<1x32xf32, #tpu.memory_space<vmem>>, %arg5: memref<64x32xbf16, #tpu.memory_space<vmem>>, %arg6: memref<1x32x32xbf16, #tpu.memory_space<vmem>>, %arg7: memref<32x8xbf16, #tpu.memory_space<vmem>>, %arg8: memref<3x32xf32, #tpu.memory_space<vmem>>, %arg9: memref<1x8xf32, #tpu.memory_space<vmem>>, %arg10: memref<8x8xf32, #tpu.memory_space<vmem>>) attributes {dimension_semantics = [#tpu.dimension_semantics<parallel>], iteration_bounds = array<i64: 1>, scalar_prefetch = 0 : i64, scratch_operands = 0 : i64, tpu.core_type = #tpu.core_type<tc>, window_params = [{transform_indices = @transform_0, window_bounds = array<i64: 8, 7>}, {transform_indices = @transform_1, window_bounds = array<i64: 8, 1>}, {pipeline_mode = #tpu.pipeline_mode<synchronous>, transform_indices = @transform_2, window_bounds = array<i64: 16, 32>}, {pipeline_mode = #tpu.pipeline_mode<synchronous>, transform_indices = @transform_3, window_bounds = array<i64: 1, 32>}, {pipeline_mode = #tpu.pipeline_mode<synchronous>, transform_indices = @transform_4, window_bounds = array<i64: 64, 32>}, {pipeline_mode = #tpu.pipeline_mode<synchronous>, transform_indices = @transform_5, window_bounds = array<i64: 1, 32, 32>}, {pipeline_mode = #tpu.pipeline_mode<synchronous>, transform_indices = @transform_6, window_bounds = array<i64: 32, 8>}, {pipeline_mode = #tpu.pipeline_mode<synchronous>, transform_indices = @transform_7, window_bounds = array<i64: 3, 32>}, {pipeline_mode = #tpu.pipeline_mode<synchronous>, transform_indices = @transform_8, window_bounds = array<i64: 1, 8>}, {transform_indices = @transform_9, window_bounds = array<i64: 8, 8>}]} {
    %c0 = arith.constant 0 : index
    %c0_0 = arith.constant 0 : index
    %0 = vector.load %arg1[%c0, %c0_0] : memref<8x7xi32, #tpu.memory_space<vmem>>, vector<8x7xi32>
    %c0_1 = arith.constant 0 : index
    %c0_2 = arith.constant 0 : index
    %1 = vector.load %arg8[%c0_1, %c0_2] : memref<3x32xf32, #tpu.memory_space<vmem>>, vector<3x32xf32>
    %2 = tpu.iota {dimensions = array<i32: 1>} : vector<8x16xi32>
    %cst = arith.constant 0.000000e+00 : f32
    %3 = vector.broadcast %cst : f32 to vector<8x16xf32>
    %4 = vector.extract_strided_slice %0 {offsets = [0, 0], sizes = [8, 1], strides = [1, 1]} : vector<8x7xi32> to vector<8x1xi32>
    %5 = vector.broadcast %4 : vector<8x1xi32> to vector<8x16xi32>
    %6 = arith.cmpi eq, %5, %2 : vector<8x16xi32>
    %7 = arith.extui %6 : vector<8x16xi1> to vector<8x16xi32>
    %8 = arith.sitofp %7 : vector<8x16xi32> to vector<8x16xf32>
    %9 = arith.addf %3, %8 : vector<8x16xf32>
    %10 = vector.extract_strided_slice %0 {offsets = [0, 1], sizes = [8, 1], strides = [1, 1]} : vector<8x7xi32> to vector<8x1xi32>
    %11 = vector.broadcast %10 : vector<8x1xi32> to vector<8x16xi32>
    %12 = arith.cmpi eq, %11, %2 : vector<8x16xi32>
    %13 = arith.extui %12 : vector<8x16xi1> to vector<8x16xi32>
    %14 = arith.sitofp %13 : vector<8x16xi32> to vector<8x16xf32>
    %15 = arith.addf %9, %14 : vector<8x16xf32>
    %16 = vector.extract_strided_slice %0 {offsets = [0, 2], sizes = [8, 1], strides = [1, 1]} : vector<8x7xi32> to vector<8x1xi32>
    %17 = vector.broadcast %16 : vector<8x1xi32> to vector<8x16xi32>
    %18 = arith.cmpi eq, %17, %2 : vector<8x16xi32>
    %19 = arith.extui %18 : vector<8x16xi1> to vector<8x16xi32>
    %20 = arith.sitofp %19 : vector<8x16xi32> to vector<8x16xf32>
    %21 = arith.addf %15, %20 : vector<8x16xf32>
    %22 = vector.extract_strided_slice %0 {offsets = [0, 3], sizes = [8, 1], strides = [1, 1]} : vector<8x7xi32> to vector<8x1xi32>
    %23 = vector.broadcast %22 : vector<8x1xi32> to vector<8x16xi32>
    %24 = arith.cmpi eq, %23, %2 : vector<8x16xi32>
    %25 = arith.extui %24 : vector<8x16xi1> to vector<8x16xi32>
    %26 = arith.sitofp %25 : vector<8x16xi32> to vector<8x16xf32>
    %27 = arith.addf %21, %26 : vector<8x16xf32>
    %28 = vector.extract_strided_slice %0 {offsets = [0, 4], sizes = [8, 1], strides = [1, 1]} : vector<8x7xi32> to vector<8x1xi32>
    %29 = vector.broadcast %28 : vector<8x1xi32> to vector<8x16xi32>
    %30 = arith.cmpi eq, %29, %2 : vector<8x16xi32>
    %31 = arith.extui %30 : vector<8x16xi1> to vector<8x16xi32>
    %32 = arith.sitofp %31 : vector<8x16xi32> to vector<8x16xf32>
    %33 = arith.addf %27, %32 : vector<8x16xf32>
    %34 = vector.extract_strided_slice %0 {offsets = [0, 5], sizes = [8, 1], strides = [1, 1]} : vector<8x7xi32> to vector<8x1xi32>
    %35 = vector.broadcast %34 : vector<8x1xi32> to vector<8x16xi32>
    %36 = arith.cmpi eq, %35, %2 : vector<8x16xi32>
    %37 = arith.extui %36 : vector<8x16xi1> to vector<8x16xi32>
    %38 = arith.sitofp %37 : vector<8x16xi32> to vector<8x16xf32>
    %39 = arith.addf %33, %38 : vector<8x16xf32>
    %40 = vector.extract_strided_slice %0 {offsets = [0, 6], sizes = [8, 1], strides = [1, 1]} : vector<8x7xi32> to vector<8x1xi32>
    %41 = vector.broadcast %40 : vector<8x1xi32> to vector<8x16xi32>
    %42 = arith.cmpi eq, %41, %2 : vector<8x16xi32>
    %43 = arith.extui %42 : vector<8x16xi1> to vector<8x16xi32>
    %44 = arith.sitofp %43 : vector<8x16xi32> to vector<8x16xf32>
    %45 = arith.addf %39, %44 : vector<8x16xf32>
    %46 = arith.truncf %45 : vector<8x16xf32> to vector<8x16xbf16>
    %c0_3 = arith.constant 0 : index
    %c0_4 = arith.constant 0 : index
    %47 = vector.load %arg3[%c0_3, %c0_4] : memref<16x32xbf16, #tpu.memory_space<vmem>>, vector<16x32xbf16>
    %cst_5 = arith.constant dense<0.000000e+00> : vector<8x32xf32>
    %48 = tpu.matmul %46, %47, %cst_5 {dimension_numbers = #tpu.dot_dimension_numbers<[1], [0], [0], [1], [0, 0, 1, 1], [], []>} : vector<8x16xbf16>, vector<16x32xbf16>, vector<8x32xf32> -> vector<8x32xf32>
    %c0_6 = arith.constant 0 : index
    %c0_7 = arith.constant 0 : index
    %49 = vector.load %arg2[%c0_6, %c0_7] : memref<8x1xf32, #tpu.memory_space<vmem>>, vector<8x1xf32>
    %c0_8 = arith.constant 0 : index
    %c0_9 = arith.constant 0 : index
    %50 = vector.load %arg4[%c0_8, %c0_9] : memref<1x32xf32, #tpu.memory_space<vmem>>, vector<1x32xf32>
    %51 = vector.broadcast %49 : vector<8x1xf32> to vector<8x32xf32>
    %52 = vector.broadcast %50 : vector<1x32xf32> to vector<8x32xf32>
    %53 = arith.mulf %51, %52 : vector<8x32xf32>
    %54 = vector.extract_strided_slice %1 {offsets = [0, 0], sizes = [1, 32], strides = [1, 1]} : vector<3x32xf32> to vector<1x32xf32>
    %55 = vector.broadcast %54 : vector<1x32xf32> to vector<8x32xf32>
    %56 = arith.addf %53, %55 : vector<8x32xf32>
    %cst_10 = arith.constant 0.000000e+00 : f32
    %57 = vector.broadcast %cst_10 : f32 to vector<8x32xf32>
    %58 = arith.maximumf %56, %57 : vector<8x32xf32>
    %c0_11 = arith.constant 0 : index
    %c0_12 = arith.constant 0 : index
    %59 = vector.load %arg5[%c0_11, %c0_12] : memref<64x32xbf16, #tpu.memory_space<vmem>>, vector<64x32xbf16>
    %60 = arith.truncf %48 : vector<8x32xf32> to vector<8x32xbf16>
    %61 = vector.extract_strided_slice %59 {offsets = [0, 0], sizes = [32, 32], strides = [1, 1]} : vector<64x32xbf16> to vector<32x32xbf16>
    %cst_13 = arith.constant dense<0.000000e+00> : vector<8x32xf32>
    %62 = tpu.matmul %60, %61, %cst_13 {dimension_numbers = #tpu.dot_dimension_numbers<[1], [0], [0], [1], [0, 0, 1, 1], [], []>} : vector<8x32xbf16>, vector<32x32xbf16>, vector<8x32xf32> -> vector<8x32xf32>
    %63 = arith.truncf %58 : vector<8x32xf32> to vector<8x32xbf16>
    %64 = vector.extract_strided_slice %59 {offsets = [32, 0], sizes = [32, 32], strides = [1, 1]} : vector<64x32xbf16> to vector<32x32xbf16>
    %cst_14 = arith.constant dense<0.000000e+00> : vector<8x32xf32>
    %65 = tpu.matmul %63, %64, %cst_14 {dimension_numbers = #tpu.dot_dimension_numbers<[1], [0], [0], [1], [0, 0, 1, 1], [], []>} : vector<8x32xbf16>, vector<32x32xbf16>, vector<8x32xf32> -> vector<8x32xf32>
    %66 = arith.addf %62, %65 : vector<8x32xf32>
    %67 = vector.extract_strided_slice %1 {offsets = [1, 0], sizes = [1, 32], strides = [1, 1]} : vector<3x32xf32> to vector<1x32xf32>
    %68 = vector.broadcast %67 : vector<1x32xf32> to vector<8x32xf32>
    %69 = arith.addf %66, %68 : vector<8x32xf32>
    %cst_15 = arith.constant 0.000000e+00 : f32
    %70 = vector.broadcast %cst_15 : f32 to vector<8x32xf32>
    %71 = arith.maximumf %69, %70 : vector<8x32xf32>
    %72 = arith.truncf %71 : vector<8x32xf32> to vector<8x32xbf16>
    %c0_16 = arith.constant 0 : index
    %c0_17 = arith.constant 0 : index
    %c0_18 = arith.constant 0 : index
    %73 = vector.load %arg6[%c0_16, %c0_17, %c0_18] : memref<1x32x32xbf16, #tpu.memory_space<vmem>>, vector<1x32x32xbf16>
    %74 = vector.shape_cast %73 : vector<1x32x32xbf16> to vector<32x32xbf16>
    %cst_19 = arith.constant dense<0.000000e+00> : vector<8x32xf32>
    %75 = tpu.matmul %72, %74, %cst_19 {dimension_numbers = #tpu.dot_dimension_numbers<[1], [0], [0], [1], [0, 0, 1, 1], [], []>} : vector<8x32xbf16>, vector<32x32xbf16>, vector<8x32xf32> -> vector<8x32xf32>
    %76 = vector.extract_strided_slice %1 {offsets = [2, 0], sizes = [1, 32], strides = [1, 1]} : vector<3x32xf32> to vector<1x32xf32>
    %77 = vector.broadcast %76 : vector<1x32xf32> to vector<8x32xf32>
    %78 = arith.addf %75, %77 : vector<8x32xf32>
    %cst_20 = arith.constant 0.000000e+00 : f32
    %79 = vector.broadcast %cst_20 : f32 to vector<8x32xf32>
    %80 = arith.maximumf %78, %79 : vector<8x32xf32>
    %81 = arith.truncf %80 : vector<8x32xf32> to vector<8x32xbf16>
    %c0_21 = arith.constant 0 : index
    %c0_22 = arith.constant 0 : index
    %82 = vector.load %arg7[%c0_21, %c0_22] : memref<32x8xbf16, #tpu.memory_space<vmem>>, vector<32x8xbf16>
    %cst_23 = arith.constant dense<0.000000e+00> : vector<8x8xf32>
    %83 = tpu.matmul %81, %82, %cst_23 {dimension_numbers = #tpu.dot_dimension_numbers<[1], [0], [0], [1], [0, 0, 1, 1], [], []>} : vector<8x32xbf16>, vector<32x8xbf16>, vector<8x8xf32> -> vector<8x8xf32>
    %c0_24 = arith.constant 0 : index
    %c0_25 = arith.constant 0 : index
    %84 = vector.load %arg9[%c0_24, %c0_25] : memref<1x8xf32, #tpu.memory_space<vmem>>, vector<1x8xf32>
    %85 = vector.broadcast %84 : vector<1x8xf32> to vector<8x8xf32>
    %86 = arith.addf %83, %85 : vector<8x8xf32>
    %c0_26 = arith.constant 0 : index
    %c0_27 = arith.constant 0 : index
    %87 = vector.load %arg10[%c0_26, %c0_27] : memref<8x8xf32, #tpu.memory_space<vmem>>, vector<8x8xf32>
    tpu.vector_store %arg10[%c0_26, %c0_27], %86 {strides = array<i32>} : memref<8x8xf32, #tpu.memory_space<vmem>>, vector<8x8xf32>,
    return
  }
  func.func @transform_0(%arg0: i32) -> (i32, i32) {
    %c0_i32 = arith.constant 0 : i32
    %c0_i32_0 = arith.constant 0 : i32
    return %arg0, %c0_i32 : i32, i32
  }
  func.func @transform_1(%arg0: i32) -> (i32, i32) {
    %c0_i32 = arith.constant 0 : i32
    %c0_i32_0 = arith.constant 0 : i32
    return %arg0, %c0_i32 : i32, i32
  }
  func.func @transform_2(%arg0: i32) -> (i32, i32) {
    %c0_i32 = arith.constant 0 : i32
    %c0_i32_0 = arith.constant 0 : i32
    %c0_i32_1 = arith.constant 0 : i32
    return %c0_i32, %c0_i32_0 : i32, i32
  }
  func.func @transform_3(%arg0: i32) -> (i32, i32) {
    %c0_i32 = arith.constant 0 : i32
    %c0_i32_0 = arith.constant 0 : i32
    %c0_i32_1 = arith.constant 0 : i32
    return %c0_i32, %c0_i32_0 : i32, i32
  }
  func.func @transform_4(%arg0: i32) -> (i32, i32) {
    %c0_i32 = arith.constant 0 : i32
    %c0_i32_0 = arith.constant 0 : i32
    %c0_i32_1 = arith.constant 0 : i32
    return %c0_i32, %c0_i32_0 : i32, i32
  }
  func.func @transform_5(%arg0: i32) -> (i32, i32, i32) {
    %c0_i32 = arith.constant 0 : i32
    %c0_i32_0 = arith.constant 0 : i32
    %c0_i32_1 = arith.constant 0 : i32
    %c0_i32_2 = arith.constant 0 : i32
    return %c0_i32, %c0_i32_0, %c0_i32_1 : i32, i32, i32
  }
  func.func @transform_6(%arg0: i32) -> (i32, i32) {
    %c0_i32 = arith.constant 0 : i32
    %c0_i32_0 = arith.constant 0 : i32
    %c0_i32_1 = arith.constant 0 : i32
    return %c0_i32, %c0_i32_0 : i32, i32
  }
  func.func @transform_7(%arg0: i32) -> (i32, i32) {
    %c0_i32 = arith.constant 0 : i32
    %c0_i32_0 = arith.constant 0 : i32
    %c0_i32_1 = arith.constant 0 : i32
    return %c0_i32, %c0_i32_0 : i32, i32
  }
  func.func @transform_8(%arg0: i32) -> (i32, i32) {
    %c0_i32 = arith.constant 0 : i32
    %c0_i32_0 = arith.constant 0 : i32
    %c0_i32_1 = arith.constant 0 : i32
    return %c0_i32, %c0_i32_0 : i32, i32
  }
  func.func @transform_9(%arg0: i32) -> (i32, i32) {
    %c0_i32 = arith.constant 0 : i32
    %c0_i32_0 = arith.constant 0 : i32
    return %arg0, %c0_i32 : i32, i32
  }
}

</mosaic_0001>

<llo_original>
// kernel: tpu_custom_call.1
$region0: #{tpu_custom_call.1}
  #allocation0 [shape = 'u32[]', space=smem, size = 0x4, offset = 0x4, fixed_abs, tag = 'smem constant byte address 0x4 - core index']
  #allocation1 [shape = 'u32[144,128]{1,0:T(1,128)}', space=vmem, size = 0x12000, scoped, tag = 'internal scratch']
  %s0 = inlined_call_operand.vmem [shape: s32[8,7], index: 0, kind: input, shape index: {}]
  %s1 = inlined_call_operand.vmem [shape: f32[8,1], index: 1, kind: input, shape index: {}]
  %s2 = inlined_call_operand.vmem [shape: bf16[16,32], index: 2, kind: input, shape index: {}]
  %s3 = inlined_call_operand.vmem [shape: f32[1,32], index: 3, kind: input, shape index: {}]
  %s4 = inlined_call_operand.vmem [shape: bf16[64,32], index: 4, kind: input, shape index: {}]
  %s5 = inlined_call_operand.vmem [shape: bf16[1,32,32], index: 5, kind: input, shape index: {}]
  %s6 = inlined_call_operand.vmem [shape: bf16[32,8], index: 6, kind: input, shape index: {}]
  %s7 = inlined_call_operand.vmem [shape: f32[3,32], index: 7, kind: input, shape index: {}]
  %s8 = inlined_call_operand.vmem [shape: f32[1,8], index: 8, kind: input, shape index: {}]
  %s9 = inlined_call_operand.hbm [shape: f32[8,8], index: 9, kind: output, shape index: {}]
  %s10 = sld [smem:[#allocation0]]
  $region46: #{tpu_custom_call.1} parent=0
    _
  %s12 = ssub.s32 1, %s10
  %s13 = scalar_select 0, %s12, %s10
  $region1: #{tpu_custom_call.1} parent=0
    #allocation2 [shape = 'u8[4096]{0}', space=vmem, size = 0x1000, scoped, tag = 'output window, operand 0, single buffered']
    #allocation3 [shape = 's32[1]{0}', space=sflag, size = 0x4, scoped, tag = 'scoped memory for tpu_custom_call.1']
    %14 = vsyncpa [#allocation3], 0
    // Predicated region
    $region2: #{tpu_custom_call.1} parent=1 // pred_check
      _
    $region3: #{tpu_custom_call.1} parent=1 // pred_check_branch
      %16 = sbr.rel (0) target = $region5
    $region4: #{tpu_custom_call.1} parent=1 // pred_region
      _
    $region5: #{tpu_custom_call.1} parent=1 // pred_fallthru
      _
    // Predicated region
    $region6: #{tpu_custom_call.1} parent=1 // pred_check
      _
    $region7: #{tpu_custom_call.1} parent=1 // pred_check_branch
      %18 = sbr.rel (0) target = $region9
    $region8: #{tpu_custom_call.1} parent=1 // pred_region
      _
    $region9: #{tpu_custom_call.1} parent=1 // pred_fallthru
      _
    // Predicated region
    $region10: #{tpu_custom_call.1} parent=1 // pred_check
      _
    $region11: #{tpu_custom_call.1} parent=1 // pred_check_branch
      %20 = sbr.rel (0) target = $region13
    $region12: #{tpu_custom_call.1} parent=1 // pred_region
      _
    $region13: #{tpu_custom_call.1} parent=1 // pred_fallthru
      _
    // Predicated region
    $region14: #{tpu_custom_call.1} parent=1 // pred_check
      _
    $region15: #{tpu_custom_call.1} parent=1 // pred_check_branch
      %22 = sbr.rel (0) target = $region17
    $region16: #{tpu_custom_call.1} parent=1 // pred_region
      _
    $region17: #{tpu_custom_call.1} parent=1 // pred_fallthru
      _
    // Predicated region
    $region18: #{tpu_custom_call.1} parent=1 // pred_check
      _
    $region19: #{tpu_custom_call.1} parent=1 // pred_check_branch
      %24 = sbr.rel (0) target = $region21
    $region20: #{tpu_custom_call.1} parent=1 // pred_region
      _
    $region21: #{tpu_custom_call.1} parent=1 // pred_fallthru
      _
    // Predicated region
    $region22: #{tpu_custom_call.1} parent=1 // pred_check
      _
    $region23: #{tpu_custom_call.1} parent=1 // pred_check_branch
      %26 = sbr.rel (0) target = $region25
    $region24: #{tpu_custom_call.1} parent=1 // pred_region
      _
    $region25: #{tpu_custom_call.1} parent=1 // pred_fallthru
      _
    // Predicated region
    $region26: #{tpu_custom_call.1} parent=1 // pred_check
      _
    $region27: #{tpu_custom_call.1} parent=1 // pred_check_branch
      %28 = sbr.rel (0) target = $region29
    $region28: #{tpu_custom_call.1} parent=1 // pred_region
      _
    $region29: #{tpu_custom_call.1} parent=1 // pred_fallthru
      _
    // Predicated region
    $region30: #{tpu_custom_call.1} parent=1 // pred_check
      _
    $region31: #{tpu_custom_call.1} parent=1 // pred_check_branch
      %30 = sbr.rel (0) target = $region33
    $region32: #{tpu_custom_call.1} parent=1 // pred_region
      _
    $region33: #{tpu_custom_call.1} parent=1 // pred_fallthru
      _
    // Predicated region
    $region34: #{tpu_custom_call.1} parent=1 // pred_check
      _
    $region35: #{tpu_custom_call.1} parent=1 // pred_check_branch
      %32 = sbr.rel (0) target = $region37
    $region36: #{tpu_custom_call.1} parent=1 // pred_region
      _
    $region37: #{tpu_custom_call.1} parent=1 // pred_fallthru
      _
    %v34 = vld [vmem:[%s0] sm:$0xff]
    %v35 = vld [vmem:[%s7] sm:$0x7]
    %v36 = vlaneseq
    %v37 = vand.u32 %v36, 127
    %38 = vset.pattern.permute.xlu0 0
    %39 = vperm.xlu0 %38, %v34
    %v40 = vpop.permute.xlu0 %39
    %vm41 = vcmp.eq.s32.totalorder %v40, %v37
    %v42 = vsel %vm41, 1, 0
    %v43 = vcvt.s32.f32 %v42
    %v44 = vadd.f32 %v43, 0.0
    %45 = vset.pattern.permute.xlu0 1
    %46 = vperm.xlu0 %45, %v34
    %v47 = vpop.permute.xlu0 %46
    %vm48 = vcmp.eq.s32.totalorder %v47, %v37
    %v49 = vsel %vm48, 1, 0
    %v50 = vcvt.s32.f32 %v49
    %v51 = vadd.f32 %v44, %v50
    %52 = vset.pattern.permute.xlu0 2
    %53 = vperm.xlu0 %52, %v34
    %v54 = vpop.permute.xlu0 %53
    %vm55 = vcmp.eq.s32.totalorder %v54, %v37
    %v56 = vsel %vm55, 1, 0
    %v57 = vcvt.s32.f32 %v56
    %v58 = vadd.f32 %v51, %v57
    %59 = vset.pattern.permute.xlu0 3
    %60 = vperm.xlu0 %59, %v34
    %v61 = vpop.permute.xlu0 %60
    %vm62 = vcmp.eq.s32.totalorder %v61, %v37
    %v63 = vsel %vm62, 1, 0
    %v64 = vcvt.s32.f32 %v63
    %v65 = vadd.f32 %v58, %v64
    %66 = vset.pattern.permute.xlu0 4
    %67 = vperm.xlu0 %66, %v34
    %v68 = vpop.permute.xlu0 %67
    %vm69 = vcmp.eq.s32.totalorder %v68, %v37
    %v70 = vsel %vm69, 1, 0
    %v71 = vcvt.s32.f32 %v70
    %v72 = vadd.f32 %v65, %v71
    %73 = vset.pattern.permute.xlu0 5
    %74 = vperm.xlu0 %73, %v34
    %v75 = vpop.permute.xlu0 %74
    %vm76 = vcmp.eq.s32.totalorder %v75, %v37
    %v77 = vsel %vm76, 1, 0
    %v78 = vcvt.s32.f32 %v77
    %v79 = vadd.f32 %v72, %v78
    %80 = vset.pattern.permute.xlu0 6
    %81 = vperm.xlu0 %80, %v34
    %v82 = vpop.permute.xlu0 %81
    %vm83 = vcmp.eq.s32.totalorder %v82, %v37
    %v84 = vsel %vm83, 1, 0
    %v85 = vcvt.s32.f32 %v84
    %v86 = vadd.f32 %v79, %v85
    %v87 = vpack.c.bf16 %v86, %v86
    %v88 = vld [vmem:[%s2] sm:$0xf]
    %v89 = vld [vmem:[%s2 + $0x4] sm:$0xf]
    %v92 = vunpack.c.l.b16 %v88
    %v93 = vunpack.c.l.b16 %v89
    %v94 = vpack.c.b16 %v93, %v92
    %vm96 = vcmask 130048
    %v98 = vsel %vm96, %v87, 0
    %100 = vmatprep.subr.bf16.mxu0 0
    %101 = vmatpush1.bf16.msra.mxu0 %v94
    %102 = vmatprep.subr.bf16.mxu0 0
    %103 = vmatpush1.bf16.msra.mxu0 0
    %104 = vmatprep.subr.bf16.mxu0 0
    %105 = vmatpush1.bf16.msra.mxu0 0
    %106 = vmatprep.subr.bf16.mxu0 0
    %107 = vmatpush1.bf16.msra.mxu0 0
    %108 = vmatprep.subr.bf16.mxu0 0
    %109 = vmatpush1.bf16.msra.mxu0 0
    %110 = vmatprep.subr.bf16.mxu0 0
    %111 = vmatpush1.bf16.msra.mxu0 0
    %112 = vmatprep.subr.bf16.mxu0 0
    %113 = vmatpush1.bf16.msra.mxu0 0
    %114 = vmatprep.subr.bf16.mxu0 0
    %115 = vmatpush1.bf16.msra.mxu0 0
    %116 = vmatprep.subr.bf16.mxu0 0
    %117 = vmatpush1.bf16.msra.mxu0 0
    %118 = vmatprep.subr.bf16.mxu0 0
    %119 = vmatpush1.bf16.msra.mxu0 0
    %120 = vmatprep.subr.bf16.mxu0 0
    %121 = vmatpush1.bf16.msra.mxu0 0
    %122 = vmatprep.subr.bf16.mxu0 0
    %123 = vmatpush1.bf16.msra.mxu0 0
    %124 = vmatprep.subr.bf16.mxu0 0
    %125 = vmatpush1.bf16.msra.mxu0 0
    %126 = vmatprep.subr.bf16.mxu0 0
    %127 = vmatpush1.bf16.msra.mxu0 0
    %128 = vmatprep.subr.bf16.mxu0 0
    %129 = vmatpush1.bf16.msra.mxu0 0
    %130 = vmatprep.subr.bf16.mxu0 0
    %131 = vmatpush1.bf16.msra.mxu0 0
    %132 = vmatprep.mubr.bf16.mxu0 0
    %133 = vmatmul.mubr.bf16.gmra.mrb[0].mxu0 %v98
    %v134 = vpop.f32.mrb[0].mxu0
    %v135 = vadd.f32 0.0, %v134
    %v136 = vpop.f32.mrb[0].mxu0
    %v137 = vpop.f32.mrb[0].mxu0
    %v138 = vpop.f32.mrb[0].mxu0
    %139 = vdwg.mxu0
    %v140 = vld [vmem:[%s1] sm:$0xff]
    %v141 = vld [vmem:[%s3] sm:$0x1]
    %143 = vset.pattern.permute.xlu0 0
    %144 = vperm.xlu0 %143, %v140
    %v145 = vpop.permute.xlu0 %144
    %v148 = vlaneseq
    %v149 = vshrl.u32 %v148, 7
    %v150 = vsub.s32 0, %v149
    %v151 = vrot.slane %v141, %v150
    %v153 = vmul.f32 %v145, %v151
    %v154 = vlaneseq
    %v155 = vshrl.u32 %v154, 7
    %v156 = vsub.s32 0, %v155
    %v157 = vrot.slane %v35, %v156
    %v158 = vadd.f32 %v153, %v157
    %v159 = vmax.f32 %v158, 0.0
    %v160 = vld [vmem:[%s4] sm:$0xf]
    %v161 = vld [vmem:[%s4 + $0x4] sm:$0xf]
    %v162 = vld [vmem:[%s4 + $0x8] sm:$0xf]
    %v163 = vld [vmem:[%s4 + $0xc] sm:$0xf]
    %v164 = vld [vmem:[%s4 + $0x10] sm:$0xf]
    %v165 = vld [vmem:[%s4 + $0x14] sm:$0xf]
    %v166 = vld [vmem:[%s4 + $0x18] sm:$0xf]
    %v167 = vld [vmem:[%s4 + $0x1c] sm:$0xf]
    %v168 = vpack.c.bf16 %v135, %v135
    %v169 = vpack.c.bf16 %v159, %v159
    %v174 = vunpack.c.l.b16 %v164
    %v175 = vunpack.c.l.b16 %v165
    %v176 = vunpack.c.l.b16 %v166
    %v177 = vunpack.c.l.b16 %v167
    %v178 = vpack.c.b16 %v175, %v174
    %v179 = vpack.c.b16 %v177, %v176
    %vm182 = vcmask 261120
    %v184 = vsel %vm182, %v169, 0
    %186 = vmatprep.subr.bf16.mxu0 0
    %187 = vmatpush1.bf16.msra.mxu0 %v178
    %188 = vmatprep.subr.bf16.mxu0 0
    %189 = vmatpush1.bf16.msra.mxu0 %v179
    %190 = vmatprep.subr.bf16.mxu0 0
    %191 = vmatpush1.bf16.msra.mxu0 0
    %192 = vmatprep.subr.bf16.mxu0 0
    %193 = vmatpush1.bf16.msra.mxu0 0
    %194 = vmatprep.subr.bf16.mxu0 0
    %195 = vmatpush1.bf16.msra.mxu0 0
    %196 = vmatprep.subr.bf16.mxu0 0
    %197 = vmatpush1.bf16.msra.mxu0 0
    %198 = vmatprep.subr.bf16.mxu0 0
    %199 = vmatpush1.bf16.msra.mxu0 0
    %200 = vmatprep.subr.bf16.mxu0 0
    %201 = vmatpush1.bf16.msra.mxu0 0
    %202 = vmatprep.subr.bf16.mxu0 0
    %203 = vmatpush1.bf16.msra.mxu0 0
    %204 = vmatprep.subr.bf16.mxu0 0
    %205 = vmatpush1.bf16.msra.mxu0 0
    %206 = vmatprep.subr.bf16.mxu0 0
    %207 = vmatpush1.bf16.msra.mxu0 0
    %208 = vmatprep.subr.bf16.mxu0 0
    %209 = vmatpush1.bf16.msra.mxu0 0
    %210 = vmatprep.subr.bf16.mxu0 0
    %211 = vmatpush1.bf16.msra.mxu0 0
    %212 = vmatprep.subr.bf16.mxu0 0
    %213 = vmatpush1.bf16.msra.mxu0 0
    %214 = vmatprep.subr.bf16.mxu0 0
    %215 = vmatpush1.bf16.msra.mxu0 0
    %216 = vmatprep.subr.bf16.mxu0 0
    %217 = vmatpush1.bf16.msra.mxu0 0
    %218 = vmatprep.mubr.bf16.mxu0 0
    %219 = vmatmul.mubr.bf16.gmra.mrb[0].mxu0 %v184
    %v220 = vpop.f32.mrb[0].mxu0
    %v221 = vadd.f32 0.0, %v220
    %v222 = vpop.f32.mrb[0].mxu0
    %v223 = vpop.f32.mrb[0].mxu0
    %v224 = vpop.f32.mrb[0].mxu0
    %225 = vdwg.mxu0
    %v230 = vunpack.c.l.b16 %v160
    %v231 = vunpack.c.l.b16 %v161
    %v232 = vunpack.c.l.b16 %v162
    %v233 = vunpack.c.l.b16 %v163
    %v234 = vpack.c.b16 %v231, %v230
    %v235 = vpack.c.b16 %v233, %v232
    %v239 = vsel %vm182, %v168, 0
    %241 = vmatprep.subr.bf16.mxu0 0
    %242 = vmatpush1.bf16.msra.mxu0 %v234
    %243 = vmatprep.subr.bf16.mxu0 0
    %244 = vmatpush1.bf16.msra.mxu0 %v235
    %245 = vmatprep.subr.bf16.mxu0 0
    %246 = vmatpush1.bf16.msra.mxu0 0
    %247 = vmatprep.subr.bf16.mxu0 0
    %248 = vmatpush1.bf16.msra.mxu0 0
    %249 = vmatprep.subr.bf16.mxu0 0
    %250 = vmatpush1.bf16.msra.mxu0 0
    %251 = vmatprep.subr.bf16.mxu0 0
    %252 = vmatpush1.bf16.msra.mxu0 0
    %253 = vmatprep.subr.bf16.mxu0 0
    %254 = vmatpush1.bf16.msra.mxu0 0
    %255 = vmatprep.subr.bf16.mxu0 0
    %256 = vmatpush1.bf16.msra.mxu0 0
    %257 = vmatprep.subr.bf16.mxu0 0
    %258 = vmatpush1.bf16.msra.mxu0 0
    %259 = vmatprep.subr.bf16.mxu0 0
    %260 = vmatpush1.bf16.msra.mxu0 0
    %261 = vmatprep.subr.bf16.mxu0 0
    %262 = vmatpush1.bf16.msra.mxu0 0
    %263 = vmatprep.subr.bf16.mxu0 0
    %264 = vmatpush1.bf16.msra.mxu0 0
    %265 = vmatprep.subr.bf16.mxu0 0
    %266 = vmatpush1.bf16.msra.mxu0 0
    %267 = vmatprep.subr.bf16.mxu0 0
    %268 = vmatpush1.bf16.msra.mxu0 0
    %269 = vmatprep.subr.bf16.mxu0 0
    %270 = vmatpush1.bf16.msra.mxu0 0
    %271 = vmatprep.subr.bf16.mxu0 0
    %272 = vmatpush1.bf16.msra.mxu0 0
    %273 = vmatprep.mubr.bf16.mxu0 0
    %274 = vmatmul.mubr.bf16.gmra.mrb[0].mxu0 %v239
    %v275 = vpop.f32.mrb[0].mxu0
    %v276 = vadd.f32 %v221, %v275
    %v277 = vpop.f32.mrb[0].mxu0
    %v278 = vpop.f32.mrb[0].mxu0
    %v279 = vpop.f32.mrb[0].mxu0
    %280 = vdwg.mxu0
    %v281 = vlaneseq
    %v282 = vshrl.u32 %v281, 7
    %v283 = vsub.s32 1, %v282
    %v284 = vrot.slane %v35, %v283
    %v285 = vadd.f32 %v276, %v284
    %v286 = vmax.f32 %v285, 0.0
    %v287 = vpack.c.bf16 %v286, %v286
    %v288 = vld [vmem:[%s5] sm:$0xf]
    %v289 = vld [vmem:[%s5 + $0x4] sm:$0xf]
    %v290 = vld [vmem:[%s5 + $0x8] sm:$0xf]
    %v291 = vld [vmem:[%s5 + $0xc] sm:$0xf]
    %v292 = vlaneseq
    %v293 = vshrl.u32 %v292, 7
    %v294 = vsub.s32 2, %v293
    %v295 = vrot.slane %v35, %v294
    %v300 = vunpack.c.l.b16 %v288
    %v301 = vunpack.c.l.b16 %v289
    %v302 = vunpack.c.l.b16 %v290
    %v303 = vunpack.c.l.b16 %v291
    %v304 = vpack.c.b16 %v301, %v300
    %v305 = vpack.c.b16 %v303, %v302
    %v309 = vsel %vm182, %v287, 0
    %311 = vmatprep.subr.bf16.mxu0 0
    %312 = vmatpush1.bf16.msra.mxu0 %v304
    %313 = vmatprep.subr.bf16.mxu0 0
    %314 = vmatpush1.bf16.msra.mxu0 %v305
    %315 = vmatprep.subr.bf16.mxu0 0
    %316 = vmatpush1.bf16.msra.mxu0 0
    %317 = vmatprep.subr.bf16.mxu0 0
    %318 = vmatpush1.bf16.msra.mxu0 0
    %319 = vmatprep.subr.bf16.mxu0 0
    %320 = vmatpush1.bf16.msra.mxu0 0
    %321 = vmatprep.subr.bf16.mxu0 0
    %322 = vmatpush1.bf16.msra.mxu0 0
    %323 = vmatprep.subr.bf16.mxu0 0
    %324 = vmatpush1.bf16.msra.mxu0 0
    %325 = vmatprep.subr.bf16.mxu0 0
    %326 = vmatpush1.bf16.msra.mxu0 0
    %327 = vmatprep.subr.bf16.mxu0 0
    %328 = vmatpush1.bf16.msra.mxu0 0
    %329 = vmatprep.subr.bf16.mxu0 0
    %330 = vmatpush1.bf16.msra.mxu0 0
    %331 = vmatprep.subr.bf16.mxu0 0
    %332 = vmatpush1.bf16.msra.mxu0 0
    %333 = vmatprep.subr.bf16.mxu0 0
    %334 = vmatpush1.bf16.msra.mxu0 0
    %335 = vmatprep.subr.bf16.mxu0 0
    %336 = vmatpush1.bf16.msra.mxu0 0
    %337 = vmatprep.subr.bf16.mxu0 0
    %338 = vmatpush1.bf16.msra.mxu0 0
    %339 = vmatprep.subr.bf16.mxu0 0
    %340 = vmatpush1.bf16.msra.mxu0 0
    %341 = vmatprep.subr.bf16.mxu0 0
    %342 = vmatpush1.bf16.msra.mxu0 0
    %343 = vmatprep.mubr.bf16.mxu0 0
    %344 = vmatmul.mubr.bf16.gmra.mrb[0].mxu0 %v309
    %v345 = vpop.f32.mrb[0].mxu0
    %v346 = vadd.f32 %v295, %v345
    %v347 = vpop.f32.mrb[0].mxu0
    %v348 = vpop.f32.mrb[0].mxu0
    %v349 = vpop.f32.mrb[0].mxu0
    %350 = vdwg.mxu0
    %v351 = vmax.f32 %v346, 0.0
    %v352 = vpack.c.bf16 %v351, %v351
    %v353 = vld [vmem:[%s6] sm:$0xf]
    %v354 = vld [vmem:[%s6 + $0x4] sm:$0xf]
    %v355 = vld [vmem:[%s6 + $0x8] sm:$0xf]
    %v356 = vld [vmem:[%s6 + $0xc] sm:$0xf]
    %v357 = vld [vmem:[%s8] sm:$0x1]
    %v359 = vlaneseq
    %v360 = vshrl.u32 %v359, 7
    %v361 = vsub.s32 0, %v360
    %v362 = vrot.slane %v357, %v361
    %v368 = vunpack.c.l.b16 %v353
    %v369 = vunpack.c.l.b16 %v354
    %v370 = vunpack.c.l.b16 %v355
    %v371 = vunpack.c.l.b16 %v356
    %v372 = vpack.c.b16 %v369, %v368
    %v373 = vpack.c.b16 %v371, %v370
    %v377 = vsel %vm182, %v352, 0
    %379 = vmatprep.subr.bf16.mxu0 0
    %380 = vmatpush1.bf16.msra.mxu0 %v372
    %381 = vmatprep.subr.bf16.mxu0 0
    %382 = vmatpush1.bf16.msra.mxu0 %v373
    %383 = vmatprep.subr.bf16.mxu0 0
    %384 = vmatpush1.bf16.msra.mxu0 0
    %385 = vmatprep.subr.bf16.mxu0 0
    %386 = vmatpush1.bf16.msra.mxu0 0
    %387 = vmatprep.subr.bf16.mxu0 0
    %388 = vmatpush1.bf16.msra.mxu0 0
    %389 = vmatprep.subr.bf16.mxu0 0
    %390 = vmatpush1.bf16.msra.mxu0 0
    %391 = vmatprep.subr.bf16.mxu0 0
    %392 = vmatpush1.bf16.msra.mxu0 0
    %393 = vmatprep.subr.bf16.mxu0 0
    %394 = vmatpush1.bf16.msra.mxu0 0
    %395 = vmatprep.subr.bf16.mxu0 0
    %396 = vmatpush1.bf16.msra.mxu0 0
    %397 = vmatprep.subr.bf16.mxu0 0
    %398 = vmatpush1.bf16.msra.mxu0 0
    %399 = vmatprep.subr.bf16.mxu0 0
    %400 = vmatpush1.bf16.msra.mxu0 0
    %401 = vmatprep.subr.bf16.mxu0 0
    %402 = vmatpush1.bf16.msra.mxu0 0
    %403 = vmatprep.subr.bf16.mxu0 0
    %404 = vmatpush1.bf16.msra.mxu0 0
    %405 = vmatprep.subr.bf16.mxu0 0
    %406 = vmatpush1.bf16.msra.mxu0 0
    %407 = vmatprep.subr.bf16.mxu0 0
    %408 = vmatpush1.bf16.msra.mxu0 0
    %409 = vmatprep.subr.bf16.mxu0 0
    %410 = vmatpush1.bf16.msra.mxu0 0
    %411 = vmatprep.mubr.bf16.mxu0 0
    %412 = vmatmul.mubr.bf16.gmra.mrb[0].mxu0 %v377
    %v413 = vpop.f32.mrb[0].mxu0
    %v414 = vadd.f32 %v362, %v413
    %v415 = vpop.f32.mrb[0].mxu0
    %v416 = vpop.f32.mrb[0].mxu0
    %v417 = vpop.f32.mrb[0].mxu0
    %418 = vdwg.mxu0
    %vm419 = vcmask 64512
    %420 = vst.msk [vmem:[#allocation2] sm:$0xff] %vm419, %v414
    // Predicated region
    $region38: #{tpu_custom_call.1} parent=1 // pred_check
      _
    $region39: #{tpu_custom_call.1} parent=1 // pred_check_branch
      %422 = sbr.rel (0) target = $region41
    $region40: #{tpu_custom_call.1} parent=1 // pred_region
      %s424 = ssub.s32 128, 128
      %425 = vsyncadd [#allocation3], %s424
      %s427 = sshll.u32 [#allocation2], 4
      %s428 = int_to_ptr.vmem [resolvable:$true] %s427
      %430 = dma.vmem_to_hbm [thread:$0]  %s428, 128, %s9, [#allocation3]
    $region41: #{tpu_custom_call.1} parent=1 // pred_fallthru
      _
    // Predicated region
    $region42: #{tpu_custom_call.1} parent=1 // pred_check
      _
    $region43: #{tpu_custom_call.1} parent=1 // pred_check_branch
      %432 = sbr.rel (0) target = $region45
    $region44: #{tpu_custom_call.1} parent=1 // pred_region
      %433 = dma.done [#allocation3], 128
    $region45: #{tpu_custom_call.1} parent=1 // pred_fallthru
      _
    %434 = vsyncpa [#allocation3], 1

</llo_original>
